<compile_context>
chip_gen: v5e
topology: v5e:2x2
jax: 0.10.0
libtpu: 0.0.40
codegen_flags: <defaults>
</compile_context>

<pallas_src>
import jax
import jax.numpy as jnp
from jax.experimental import pallas as pl
from jax.experimental.pallas import tpu as pltpu

_P_COLS = 24  # packed-parameter block width


def mlp_kernel(params_ref, xt_ref, ot_ref):
    # params_ref: (8, 24)  [:,0:4]=W1, [:,4]=b1, [0:3,8:16]=W2, [0:3,16]=b2
    # xt_ref:     (4, TB)  batch on the lane axis
    # ot_ref:     (3, TB)
    p = params_ref[...]
    w1 = p[:, 0:4]                      # (8, 4)
    b1 = p[:, 4:5]                      # (8, 1)
    w2 = p[0:3, 8:16]                   # (3, 8)
    b2 = p[0:3, 16:17]                  # (3, 1)

    x = xt_ref[...]                     # (4, TB)
    h = jnp.dot(w1, x, preferred_element_type=jnp.float32) + b1
    h = jnp.maximum(h, 0.0)             # ReLU, (8, TB)
    o = jnp.dot(w2, h, preferred_element_type=jnp.float32) + b2
    ot_ref[...] = o                     # (3, TB)


def _round_up(n, m):
    return ((n + m - 1) // m) * m


def _pack_params(w1, b1, w2, b2):
    p = jnp.zeros((8, _P_COLS), jnp.float32)
    p = p.at[:, 0:4].set(w1)
    p = p.at[:, 4].set(b1)
    p = p.at[0:3, 8:16].set(w2)
    p = p.at[0:3, 16].set(b2)
    return p


def multiclass_forward(x, w1, b1, w2, b2, *, tb_max=65536,
                       small_batch_threshold=1024, use_pallas=None,
                       transposed_output=False):
    """Forward pass of Linear(4,8) -> ReLU -> Linear(8,3).

    x:  (B, 4) f32
    w1: (8, 4) f32 (PyTorch [out, in] layout, used as-is)
    b1: (8,)   f32
    w2: (3, 8) f32
    b2: (3,)   f32
    returns (B, 3) f32   (or (3, B) if transposed_output=True)
    """
    x = jnp.asarray(x, jnp.float32)
    w1 = jnp.asarray(w1, jnp.float32)
    b1 = jnp.asarray(b1, jnp.float32)
    w2 = jnp.asarray(w2, jnp.float32)
    b2 = jnp.asarray(b2, jnp.float32)
    B = x.shape[0]

    if use_pallas is None:
        use_pallas = B > small_batch_threshold
    if not use_pallas:
        # Small-batch fast path: the fused XLA matmul chain beats pallas_call
        # fixed cost + the two relayout passes for IRIS-sized batches.
        out = jnp.maximum(x @ w1.T + b1, 0.0) @ w2.T + b2
        return out.T if transposed_output else out

    # ---------------- Pallas path ----------------
    # Glue: batch on the lane (last) axis so in-kernel loads/stores are
    # lane-dense.  (Kept because the module interface is (B, 4) -> (B, 3).)
    xt = x.T                                                 # (4, B)
    if B < 128:
        xt = jnp.pad(xt, ((0, 0), (0, 128 - B)))             # tiny pad only
    n = xt.shape[1]                                          # lane extent
    cols = _round_up(n, 128)

    tb_max = max(128, (int(tb_max) // 128) * 128)
    TB = min(tb_max, cols)
    if cols >= 256:
        # Keep >= 2 grid steps so the "parallel" batch axis can shard across
        # both TensorCores on v7x (harmless extra step on v5e/v6e).  This also
        # guarantees TB <= n, so only standard ragged edge blocks occur.
        TB = min(TB, _round_up(pl.cdiv(cols, 2), 128))
    grid = (pl.cdiv(n, TB),)

    params = _pack_params(w1, b1, w2, b2)                    # (8, 24)

    # Double-buffered (sublane-padded) in/out blocks plus headroom for the
    # (8, TB) f32 intermediates Mosaic materialises in VMEM.
    vmem_limit = int(min(384 * TB + (2 << 20), 48 << 20))

    out_t = pl.pallas_call(
        mlp_kernel,
        out_shape=jax.ShapeDtypeStruct((3, n), jnp.float32),
        grid=grid,
        in_specs=[
            pl.BlockSpec((8, _P_COLS), lambda i: (0, 0)),    # packed params
            pl.BlockSpec((4, TB), lambda i: (0, i)),         # xT batch tiles
        ],
        out_specs=pl.BlockSpec((3, TB), lambda i: (0, i)),
        compiler_params=pltpu.CompilerParams(
            dimension_semantics=("parallel",),
            vmem_limit_bytes=vmem_limit),
    )(params, xt)

    out_t = out_t[:, :B]                                     # (3, B)
    if transposed_output:
        return out_t                                         # lane-dense slab
    return out_t.T                                           # PyTorch (B, 3)


def init_params(key):
    """Deterministic init mimicking PyTorch nn.Linear default
    (U[-1/sqrt(fan_in), 1/sqrt(fan_in)])."""
    k1, k2, k3, k4 = jax.random.split(key, 4)
    bound1 = 1.0 / jnp.sqrt(4.0)
    bound2 = 1.0 / jnp.sqrt(8.0)
    w1 = jax.random.uniform(k1, (8, 4), jnp.float32, -bound1, bound1)
    b1 = jax.random.uniform(k2, (8,), jnp.float32, -bound1, bound1)
    w2 = jax.random.uniform(k3, (3, 8), jnp.float32, -bound2, bound2)
    b2 = jax.random.uniform(k4, (3,), jnp.float32, -bound2, bound2)
    return w1, b1, w2, b2


if __name__ == "__main__":
    key = jax.random.PRNGKey(0)
    k_x, k_p = jax.random.split(key)

    # IRIS-like input: batch of 8 samples, 4 features each.
    x = jax.random.normal(k_x, (8, 4), jnp.float32)
    w1, b1, w2, b2 = init_params(k_p)

    # Force the Pallas path so the kernel is exercised even at tiny batch.
    out = jax.block_until_ready(
        multiclass_forward(x, w1, b1, w2, b2, use_pallas=True))
    ref = jnp.maximum(x @ w1.T + b1, 0.0) @ w2.T + b2
    assert out.shape == (8, 3)
    assert jnp.allclose(out, ref, atol=1e-4, rtol=1e-4)

    # Larger, non-divisible batch: ragged last tile + >= 2 grid steps.
    xb = jax.random.normal(k_x, (1000, 4), jnp.float32)
    outb = jax.block_until_ready(
        multiclass_forward(xb, w1, b1, w2, b2, use_pallas=True, tb_max=512))
    refb = jnp.maximum(xb @ w1.T + b1, 0.0) @ w2.T + b2
    assert outb.shape == (1000, 3)
    assert jnp.allclose(outb, refb, atol=1e-4, rtol=1e-4)

    # Small-batch fast path (plain fused XLA ops).
    outs = jax.block_until_ready(multiclass_forward(x, w1, b1, w2, b2))
    assert outs.shape == (8, 3)
    assert jnp.allclose(outs, ref, atol=1e-5, rtol=1e-5)

    print("KERNEL_OK")
</pallas_src>

<mosaic_0001>
module attributes {stable_mosaic.version = 11 : i64} {
  func.func @mlp_kernel(%arg0: i32, %arg1: memref<8x24xf32, #tpu.memory_space<vmem>>, %arg2: memref<4x128xf32, #tpu.memory_space<vmem>>, %arg3: memref<3x128xf32, #tpu.memory_space<vmem>>) attributes {dimension_semantics = [#tpu.dimension_semantics<parallel>], iteration_bounds = array<i64: 1>, scalar_prefetch = 0 : i64, scratch_operands = 0 : i64, tpu.core_type = #tpu.core_type<tc>, window_params = [{pipeline_mode = #tpu.pipeline_mode<synchronous>, transform_indices = @transform_0, window_bounds = array<i64: 8, 24>}, {transform_indices = @transform_1, window_bounds = array<i64: 4, 128>}, {transform_indices = @transform_2, window_bounds = array<i64: 3, 128>}]} {
    %c0 = arith.constant 0 : index
    %c0_0 = arith.constant 0 : index
    %0 = vector.load %arg1[%c0, %c0_0] : memref<8x24xf32, #tpu.memory_space<vmem>>, vector<8x24xf32>
    %1 = vector.extract_strided_slice %0 {offsets = [0, 0], sizes = [8, 4], strides = [1, 1]} : vector<8x24xf32> to vector<8x4xf32>
    %2 = vector.extract_strided_slice %0 {offsets = [0, 4], sizes = [8, 1], strides = [1, 1]} : vector<8x24xf32> to vector<8x1xf32>
    %3 = vector.extract_strided_slice %0 {offsets = [0, 8], sizes = [3, 8], strides = [1, 1]} : vector<8x24xf32> to vector<3x8xf32>
    %4 = vector.extract_strided_slice %0 {offsets = [0, 16], sizes = [3, 1], strides = [1, 1]} : vector<8x24xf32> to vector<3x1xf32>
    %c0_1 = arith.constant 0 : index
    %c0_2 = arith.constant 0 : index
    %5 = vector.load %arg2[%c0_1, %c0_2] : memref<4x128xf32, #tpu.memory_space<vmem>>, vector<4x128xf32>
    %cst = arith.constant dense<0.000000e+00> : vector<8x128xf32>
    %6 = tpu.matmul %1, %5, %cst {dimension_numbers = #tpu.dot_dimension_numbers<[1], [0], [0], [1], [0, 0, 1, 1], [], []>} : vector<8x4xf32>, vector<4x128xf32>, vector<8x128xf32> -> vector<8x128xf32>
    %7 = vector.broadcast %2 : vector<8x1xf32> to vector<8x128xf32>
    %8 = arith.addf %6, %7 : vector<8x128xf32>
    %cst_3 = arith.constant 0.000000e+00 : f32
    %9 = vector.broadcast %cst_3 : f32 to vector<8x128xf32>
    %10 = arith.maximumf %8, %9 : vector<8x128xf32>
    %cst_4 = arith.constant dense<0.000000e+00> : vector<3x128xf32>
    %11 = tpu.matmul %3, %10, %cst_4 {dimension_numbers = #tpu.dot_dimension_numbers<[1], [0], [0], [1], [0, 0, 1, 1], [], []>} : vector<3x8xf32>, vector<8x128xf32>, vector<3x128xf32> -> vector<3x128xf32>
    %12 = vector.broadcast %4 : vector<3x1xf32> to vector<3x128xf32>
    %13 = arith.addf %11, %12 : vector<3x128xf32>
    %c0_5 = arith.constant 0 : index
    %c0_6 = arith.constant 0 : index
    %14 = vector.load %arg3[%c0_5, %c0_6] : memref<3x128xf32, #tpu.memory_space<vmem>>, vector<3x128xf32>
    tpu.vector_store %arg3[%c0_5, %c0_6], %13 {strides = array<i32>} : memref<3x128xf32, #tpu.memory_space<vmem>>, vector<3x128xf32>,
    return
  }
  func.func @transform_0(%arg0: i32) -> (i32, i32) {
    %c0_i32 = arith.constant 0 : i32
    %c0_i32_0 = arith.constant 0 : i32
    %c0_i32_1 = arith.constant 0 : i32
    return %c0_i32, %c0_i32_0 : i32, i32
  }
  func.func @transform_1(%arg0: i32) -> (i32, i32) {
    %c0_i32 = arith.constant 0 : i32
    %c0_i32_0 = arith.constant 0 : i32
    return %c0_i32, %arg0 : i32, i32
  }
  func.func @transform_2(%arg0: i32) -> (i32, i32) {
    %c0_i32 = arith.constant 0 : i32
    %c0_i32_0 = arith.constant 0 : i32
    return %c0_i32, %arg0 : i32, i32
  }
}

</mosaic_0001>

<llo_original>
// kernel: tpu_custom_call.1
$region0: #{tpu_custom_call.1}
  #allocation0 [shape = 'u32[]', space=smem, size = 0x4, offset = 0x4, fixed_abs, tag = 'smem constant byte address 0x4 - core index']
  #allocation1 [shape = 'u32[72,128]{1,0:T(1,128)}', space=vmem, size = 0x9000, scoped, tag = 'internal scratch']
  %s0 = inlined_call_operand.hbm [shape: f32[8,24], index: 0, kind: input, shape index: {}]
  %s1 = inlined_call_operand.hbm [shape: f32[4,128], index: 1, kind: input, shape index: {}]
  %s2 = inlined_call_operand.hbm [shape: f32[3,128], index: 2, kind: output, shape index: {}]
  %s3 = sld [smem:[#allocation0]]
  $region26: #{tpu_custom_call.1} parent=0
    _
  %s5 = ssub.s32 1, %s3
  %s6 = scalar_select 0, %s5, %s3
  $region1: #{tpu_custom_call.1} parent=0
    #allocation2 [shape = 'u8[4096]{0}', space=vmem, size = 0x1000, scoped, tag = 'input window, operand 0, single buffered']
    #allocation3 [shape = 's32[1]{0}', space=sflag, size = 0x4, scoped, tag = 'scoped memory for tpu_custom_call.1']
    #allocation4 [shape = 's32[1]{0}', space=sflag, size = 0x4, scoped, tag = 'scoped memory for tpu_custom_call.1']
    #allocation5 [shape = 'u8[2048]{0}', space=vmem, size = 0x800, scoped, tag = 'input window, operand 1, single buffered']
    #allocation6 [shape = 's32[1]{0}', space=sflag, size = 0x4, scoped, tag = 'scoped memory for tpu_custom_call.1']
    #allocation7 [shape = 'u8[2048]{0}', space=vmem, size = 0x800, scoped, tag = 'output window, operand 0, single buffered']
    %7 = vsyncpa [#allocation3], 0
    %8 = vsyncpa [#allocation6], 0
    %9 = vsyncpa [#allocation4], 0
    // Predicated region
    $region2: #{tpu_custom_call.1} parent=1 // pred_check
      _
    $region3: #{tpu_custom_call.1} parent=1 // pred_check_branch
      %11 = sbr.rel (0) target = $region5
    $region4: #{tpu_custom_call.1} parent=1 // pred_region
      %13 = vsyncadd [#allocation3], 0
      %s15 = sshll.u32 %s0, 4
      %s16 = int_to_ptr.hbm [resolvable:$true] %s15
      %s17 = sshll.u32 [#allocation2], 4
      %s18 = int_to_ptr.vmem [resolvable:$true] %s17
      %20 = dma.hbm_to_vmem [thread:$0]  %s16, 128, %s18, [#allocation3]
    $region5: #{tpu_custom_call.1} parent=1 // pred_fallthru
      _
    // Predicated region
    $region6: #{tpu_custom_call.1} parent=1 // pred_check
      _
    $region7: #{tpu_custom_call.1} parent=1 // pred_check_branch
      %22 = sbr.rel (0) target = $region9
    $region8: #{tpu_custom_call.1} parent=1 // pred_region
      %24 = vsyncadd [#allocation6], 0
      %s26 = sshll.u32 %s1, 4
      %s27 = int_to_ptr.hbm [resolvable:$true] %s26
      %s28 = sshll.u32 [#allocation5], 4
      %s29 = int_to_ptr.vmem [resolvable:$true] %s28
      %31 = dma.hbm_to_vmem [thread:$0]  %s27, 64, %s29, [#allocation6]
    $region9: #{tpu_custom_call.1} parent=1 // pred_fallthru
      _
    // Predicated region
    $region10: #{tpu_custom_call.1} parent=1 // pred_check
      _
    $region11: #{tpu_custom_call.1} parent=1 // pred_check_branch
      %33 = sbr.rel (0) target = $region13
    $region12: #{tpu_custom_call.1} parent=1 // pred_region
      %35 = dma.done [#allocation3], 128
    $region13: #{tpu_custom_call.1} parent=1 // pred_fallthru
      _
    // Predicated region
    $region14: #{tpu_custom_call.1} parent=1 // pred_check
      _
    $region15: #{tpu_custom_call.1} parent=1 // pred_check_branch
      %37 = sbr.rel (0) target = $region17
    $region16: #{tpu_custom_call.1} parent=1 // pred_region
      %39 = dma.done [#allocation6], 64
    $region17: #{tpu_custom_call.1} parent=1 // pred_fallthru
      _
    %v40 = vld [vmem:[#allocation2] sm:$0xff]
    %v41 = vld [vmem:[#allocation5] sm:$0xf]
    %43 = vset.pattern.permute.xlu0 4
    %44 = vperm.xlu0 %43, %v40
    %v45 = vpop.permute.xlu0 %44
    %vm47 = vcmask 31744
    %v48 = vsel %vm47, %v40, 0
    %vm50 = vcmask 1043456
    %v52 = vsel %vm50, %v41, 0
    %54 = vmatpush.msra.mxu0 0.0
    %55 = vmatpush.msra.mxu0 0.0
    %56 = vmatpush.msra.mxu0 0.0
    %57 = vmatpush.msra.mxu0 0.0
    %58 = vmatpush.msra.mxu0 0.0
    %59 = vmatpush.msra.mxu0 0.0
    %60 = vmatpush.msra.mxu0 0.0
    %61 = vmatpush.msra.mxu0 0.0
    %62 = vmatpush.msra.mxu0 0.0
    %63 = vmatpush.msra.mxu0 0.0
    %64 = vmatpush.msra.mxu0 0.0
    %65 = vmatpush.msra.mxu0 0.0
    %66 = vmatpush.msra.mxu0 0.0
    %67 = vmatpush.msra.mxu0 0.0
    %68 = vmatpush.msra.mxu0 0.0
    %69 = vmatpush.msra.mxu0 %v52
    %70 = vmatmul.f32.gmra.mxu0 %v48
    %v71 = vpop.f32.mrf.mxu0
    %v72 = vadd.f32 %v45, %v71
    %73 = vdwg.mxu0
    %v74 = vmax.f32 %v72, 0.0
    %75 = vset.pattern.permute.xlu0 16
    %76 = vperm.xlu0 %75, %v40
    %v77 = vpop.permute.xlu0 %76
    %79 = vrot.lane.b32.xlu0 %v40, 120
    %v80 = vpop.permute.xlu0 %79
    %vm81 = vcmask 64512
    %v82 = vsel %vm81, %v80, 0
    %84 = vmatpush.msra.mxu0 0.0
    %85 = vmatpush.msra.mxu0 0.0
    %86 = vmatpush.msra.mxu0 0.0
    %87 = vmatpush.msra.mxu0 0.0
    %88 = vmatpush.msra.mxu0 0.0
    %89 = vmatpush.msra.mxu0 0.0
    %90 = vmatpush.msra.mxu0 0.0
    %91 = vmatpush.msra.mxu0 0.0
    %92 = vmatpush.msra.mxu0 0.0
    %93 = vmatpush.msra.mxu0 0.0
    %94 = vmatpush.msra.mxu0 0.0
    %95 = vmatpush.msra.mxu0 0.0
    %96 = vmatpush.msra.mxu0 0.0
    %97 = vmatpush.msra.mxu0 0.0
    %98 = vmatpush.msra.mxu0 0.0
    %99 = vmatpush.msra.mxu0 %v74
    %100 = vmatmul.f32.gmra.mxu0 %v82
    %v101 = vpop.f32.mrf.mxu0
    %v102 = vadd.f32 %v77, %v101
    %103 = vdwg.mxu0
    %104 = vst [vmem:[#allocation7] sm:$0x7] %v102
    // Predicated region
    $region18: #{tpu_custom_call.1} parent=1 // pred_check
      _
    $region19: #{tpu_custom_call.1} parent=1 // pred_check_branch
      %106 = sbr.rel (0) target = $region21
    $region20: #{tpu_custom_call.1} parent=1 // pred_region
      %108 = vsyncadd [#allocation4], 0
      %s110 = sshll.u32 [#allocation7], 4
      %s111 = int_to_ptr.vmem [resolvable:$true] %s110
      %s112 = sshll.u32 %s2, 4
      %s113 = int_to_ptr.hbm [resolvable:$true] %s112
      %115 = dma.vmem_to_hbm [thread:$0]  %s111, 64, %s113, [#allocation4]
    $region21: #{tpu_custom_call.1} parent=1 // pred_fallthru
      _
    // Predicated region
    $region22: #{tpu_custom_call.1} parent=1 // pred_check
      _
    $region23: #{tpu_custom_call.1} parent=1 // pred_check_branch
      %117 = sbr.rel (0) target = $region25
    $region24: #{tpu_custom_call.1} parent=1 // pred_region
      %119 = dma.done [#allocation4], 64
    $region25: #{tpu_custom_call.1} parent=1 // pred_fallthru
      _
    %120 = vsyncpa [#allocation3], 1
    %121 = vsyncpa [#allocation6], 1
    %122 = vsyncpa [#allocation4], 1

</llo_original>
